<compile_context>
chip_gen: v6e
topology: v6e:2x2x1
jax: 0.10.0
libtpu: 0.0.40
codegen_flags: <defaults>
</compile_context>

<pallas_src>
import functools

import jax
import jax.numpy as jnp
from jax.experimental import pallas as pl
from jax.experimental.pallas import tpu as pltpu

_LANES = 128
_SUBLANES = 8


def _round_up(x, m):
    return ((x + m - 1) // m) * m


def _ordinal_loss_kernel(cut_ref, pred_ref, label_ref, out_ref, *,
                         num_cut, n_tiles, rows_last):
    t = pl.program_id(0)

    @pl.when(t == 0)
    def _():
        out_ref[...] = jnp.zeros_like(out_ref)

    pred = pred_ref[...]                      # (T, 128) f32, lane-dense samples
    label = label_ref[...]                    # (T, 128) i32, class ids

    # Read the (tiny) cutpoint vector once from SMEM as python-side scalars.
    cuts = [cut_ref[k] for k in range(num_cut)]

    # Gather-then-sigmoid with shared equality masks:
    #   upper cut for label k  = cuts[k]      (k < num_cut), else +1e30 -> sigmoid = 1
    #   lower cut for label k  = cuts[k - 1]  (k > 0),       else -1e30 -> sigmoid = 0
    big = jnp.float32(1e30)
    cut_upper = jnp.full(pred.shape, big, jnp.float32)
    cut_lower = jnp.full(pred.shape, -big, jnp.float32)
    for k in range(num_cut + 1):
        eq = label == k                       # ONE compare, reused by both selects
        if k < num_cut:
            cut_upper = jnp.where(eq, cuts[k], cut_upper)
        if k > 0:
            cut_lower = jnp.where(eq, cuts[k - 1], cut_lower)

    upper = jax.nn.sigmoid(cut_upper - pred)  # 2 sigmoids + 1 log total (EUP)
    lower = jax.nn.sigmoid(cut_lower - pred)
    eps = 1e-15
    lik = jnp.clip(upper - lower, eps, 1.0 - eps)
    log_lik = jnp.log(lik)

    def partial_sum(x):
        # (T, 128) -> (8, 128): vreg-wise tree add over the T/8 sublane groups.
        return jnp.sum(x.reshape(-1, _SUBLANES, _LANES), axis=0)

    t_rows = pred.shape[0]
    if rows_last == t_rows:
        # Every block (including the last) is fully in-bounds: no mask, ever.
        out_ref[...] += partial_sum(log_lik)
    else:
        @pl.when(t != n_tiles - 1)
        def _():
            out_ref[...] += partial_sum(log_lik)

        @pl.when(t == n_tiles - 1)
        def _():
            # Only the final (partially out-of-bounds) block pays for a mask.
            rid = jax.lax.broadcasted_iota(jnp.int32, log_lik.shape, 0)
            out_ref[...] += partial_sum(jnp.where(rid < rows_last, log_lik, 0.0))


def ordinal_regression_loss(pred, label, cutpoints, *, tile_rows=2048):
    """pred: (N,1) or (N,) f32 logits; label: (N,1)/(N,) int class ids;
    cutpoints: (C-1,) f32.  Returns scalar f32 loss, matching
    OrdinalRegressionLoss.forward (mean negative log-likelihood)."""
    if label is None:                         # PyTorch forward returns 0 for label=None
        return jnp.float32(0.0)

    pred = jnp.asarray(pred, jnp.float32).reshape(-1)
    label = jnp.asarray(label, jnp.int32).reshape(-1)
    cut = jnp.asarray(cutpoints, jnp.float32).reshape(-1)

    n = pred.shape[0]
    num_cut = cut.shape[0]

    rows = -(-n // _LANES)                                 # ceil(N / 128)
    rows_p = _round_up(max(rows, _SUBLANES), _SUBLANES)    # sublane granularity
    n_pad = rows_p * _LANES
    if n_pad != n:
        # Minimal pad (< 1024 samples) with benign sentinels:
        #   label=0, pred=-1e9  ->  upper=sigmoid(cut0+1e9)=1, lower=sigmoid(-1e30+1e9)=0
        #   -> lik=1 -> log_lik=0 (exact zero contribution, no in-kernel mask).
        # When N is already a multiple of 1024 this branch is skipped and the
        # reshape below is a free bitcast (no extra HBM traffic).
        pred = jnp.pad(pred, (0, n_pad - n), constant_values=-1e9)
        label = jnp.pad(label, (0, n_pad - n), constant_values=0)
    pred2 = pred.reshape(rows_p, _LANES)
    label2 = label.reshape(rows_p, _LANES)

    t_rows = min(_round_up(max(tile_rows, _SUBLANES), _SUBLANES), rows_p)
    n_tiles = -(-rows_p // t_rows)
    rows_last = rows_p - (n_tiles - 1) * t_rows            # valid rows in last block

    kernel = functools.partial(_ordinal_loss_kernel, num_cut=num_cut,
                               n_tiles=n_tiles, rows_last=rows_last)

    out = pl.pallas_call(
        kernel,
        out_shape=jax.ShapeDtypeStruct((_SUBLANES, _LANES), jnp.float32),
        grid_spec=pltpu.PrefetchScalarGridSpec(
            num_scalar_prefetch=0,
            grid=(n_tiles,),
            in_specs=[
                pl.BlockSpec(memory_space=pltpu.MemorySpace.SMEM),     # cutpoints
                pl.BlockSpec((t_rows, _LANES), lambda t: (t, 0)),      # pred
                pl.BlockSpec((t_rows, _LANES), lambda t: (t, 0)),      # label
            ],
            out_specs=pl.BlockSpec((_SUBLANES, _LANES), lambda t: (0, 0)),
        ),
        compiler_params=pltpu.CompilerParams(
            dimension_semantics=("arbitrary",)),
    )(cut, pred2, label2)

    return -jnp.sum(out) / jnp.float32(n)


def make_cutpoints(num_class, scale=20.0):
    """Deterministic parameter init matching the PyTorch __init__ (train_cutpoints=False).
    Note: like the PyTorch code, this divides by (num_class - 2)."""
    num_cut = num_class - 1
    return (jnp.arange(num_cut, dtype=jnp.float32) * scale / (num_class - 2)
            - scale / 2.0)


def _reference_loss(pred, label, cutpoints):
    # Pure-JAX replica of the PyTorch forward, for verification.
    sig = jax.nn.sigmoid(cutpoints[None, :] - pred)                  # (N, C-1)
    link = jnp.concatenate(
        [sig[:, :1], sig[:, 1:] - sig[:, :-1], 1.0 - sig[:, -1:]], axis=1)  # (N, C)
    eps = 1e-15
    log_lik = jnp.log(jnp.clip(link, eps, 1.0 - eps))
    gathered = jnp.take_along_axis(log_lik, label, axis=1)           # (N, 1)
    return -jnp.mean(gathered)


if __name__ == "__main__":
    num_class = 10
    scale = 20.0
    cutpoints = make_cutpoints(num_class, scale)

    key = jax.random.PRNGKey(0)

    # Cases exercise: sentinel pad + single tile (333); zero-copy exact fit with
    # multi-tile accumulation (4096); pad + exact last tile (5000); pad + partial
    # last block -> last-tile-only mask (2432); zero-copy + partial last block (5120).
    cases = ((333, 2048), (4096, 8), (5000, 8), (2432, 16), (5120, 16))
    for n, tile_rows in cases:
        k_pred, k_label = jax.random.split(jax.random.fold_in(key, n))
        pred = jax.random.normal(k_pred, (n, 1), jnp.float32) * 3.0
        label = jax.random.randint(k_label, (n, 1), 0, num_class, dtype=jnp.int32)

        loss = ordinal_regression_loss(pred, label, cutpoints, tile_rows=tile_rows)
        loss = jax.block_until_ready(loss)

        ref = _reference_loss(pred, label, cutpoints)
        assert jnp.allclose(loss, ref, rtol=1e-4, atol=1e-5), \
            (n, tile_rows, float(loss), float(ref))

    # label=None path matches PyTorch (loss == 0).
    assert float(ordinal_regression_loss(pred, None, cutpoints)) == 0.0

    print("KERNEL_OK")
</pallas_src>

<mosaic_0001>
module attributes {stable_mosaic.version = 11 : i64} {
  func.func @_ordinal_loss_kernel(%arg0: i32, %arg1: memref<9xf32, #tpu.memory_space<smem>>, %arg2: memref<8x128xf32, #tpu.memory_space<vmem>>, %arg3: memref<8x128xi32, #tpu.memory_space<vmem>>, %arg4: memref<8x128xf32, #tpu.memory_space<vmem>>) attributes {dimension_semantics = [#tpu.dimension_semantics<arbitrary>], iteration_bounds = array<i64: 1>, scalar_prefetch = 0 : i64, scratch_operands = 0 : i64, tpu.core_type = #tpu.core_type<tc>, window_params = [{transform_indices = @transform_0, window_bounds = array<i64: 9>}, {transform_indices = @transform_1, window_bounds = array<i64: 8, 128>}, {transform_indices = @transform_2, window_bounds = array<i64: 8, 128>}, {pipeline_mode = #tpu.pipeline_mode<synchronous>, transform_indices = @transform_3, window_bounds = array<i64: 8, 128>}]} {
    %c0_i32 = arith.constant 0 : i32
    %0 = arith.cmpi eq, %arg0, %c0_i32 : i32
    %1 = arith.extui %0 : i1 to i32
    %c0_i32_0 = arith.constant 0 : i32
    %2 = arith.cmpi ne, %1, %c0_i32_0 : i32
    scf.if %2 {
      %cst_17 = arith.constant 0.000000e+00 : f32
      %96 = vector.broadcast %cst_17 : f32 to vector<8x128xf32>
      %c0_18 = arith.constant 0 : index
      %c0_19 = arith.constant 0 : index
      %97 = vector.load %arg4[%c0_18, %c0_19] : memref<8x128xf32, #tpu.memory_space<vmem>>, vector<8x128xf32>
      tpu.vector_store %arg4[%c0_18, %c0_19], %96 {strides = array<i32>} : memref<8x128xf32, #tpu.memory_space<vmem>>, vector<8x128xf32>,
    } else {
    }
    %c0 = arith.constant 0 : index
    %c0_1 = arith.constant 0 : index
    %3 = vector.load %arg2[%c0, %c0_1] : memref<8x128xf32, #tpu.memory_space<vmem>>, vector<8x128xf32>
    %c0_2 = arith.constant 0 : index
    %c0_3 = arith.constant 0 : index
    %4 = vector.load %arg3[%c0_2, %c0_3] : memref<8x128xi32, #tpu.memory_space<vmem>>, vector<8x128xi32>
    %c0_4 = arith.constant 0 : index
    %5 = memref.load %arg1[%c0_4] : memref<9xf32, #tpu.memory_space<smem>>
    %c1 = arith.constant 1 : index
    %6 = memref.load %arg1[%c1] : memref<9xf32, #tpu.memory_space<smem>>
    %c2 = arith.constant 2 : index
    %7 = memref.load %arg1[%c2] : memref<9xf32, #tpu.memory_space<smem>>
    %c3 = arith.constant 3 : index
    %8 = memref.load %arg1[%c3] : memref<9xf32, #tpu.memory_space<smem>>
    %c4 = arith.constant 4 : index
    %9 = memref.load %arg1[%c4] : memref<9xf32, #tpu.memory_space<smem>>
    %c5 = arith.constant 5 : index
    %10 = memref.load %arg1[%c5] : memref<9xf32, #tpu.memory_space<smem>>
    %c6 = arith.constant 6 : index
    %11 = memref.load %arg1[%c6] : memref<9xf32, #tpu.memory_space<smem>>
    %c7 = arith.constant 7 : index
    %12 = memref.load %arg1[%c7] : memref<9xf32, #tpu.memory_space<smem>>
    %c8 = arith.constant 8 : index
    %13 = memref.load %arg1[%c8] : memref<9xf32, #tpu.memory_space<smem>>
    %cst = arith.constant 1.000000e+30 : f32
    %14 = vector.broadcast %cst : f32 to vector<8x128xf32>
    %cst_5 = arith.constant 0.000000e+00 : f32
    %cst_6 = arith.constant 1.000000e+30 : f32
    %15 = arith.subf %cst_5, %cst_6 : f32
    %16 = vector.broadcast %15 : f32 to vector<8x128xf32>
    %c0_i32_7 = arith.constant 0 : i32
    %17 = vector.broadcast %c0_i32_7 : i32 to vector<8x128xi32>
    %18 = arith.cmpi eq, %4, %17 : vector<8x128xi32>
    %19 = vector.broadcast %5 : f32 to vector<8x128xf32>
    %20 = arith.select %18, %19, %14 : vector<8x128xi1>, vector<8x128xf32>
    %c1_i32 = arith.constant 1 : i32
    %21 = vector.broadcast %c1_i32 : i32 to vector<8x128xi32>
    %22 = arith.cmpi eq, %4, %21 : vector<8x128xi32>
    %23 = vector.broadcast %6 : f32 to vector<8x128xf32>
    %24 = arith.select %22, %23, %20 : vector<8x128xi1>, vector<8x128xf32>
    %25 = vector.broadcast %5 : f32 to vector<8x128xf32>
    %26 = arith.select %22, %25, %16 : vector<8x128xi1>, vector<8x128xf32>
    %c2_i32 = arith.constant 2 : i32
    %27 = vector.broadcast %c2_i32 : i32 to vector<8x128xi32>
    %28 = arith.cmpi eq, %4, %27 : vector<8x128xi32>
    %29 = vector.broadcast %7 : f32 to vector<8x128xf32>
    %30 = arith.select %28, %29, %24 : vector<8x128xi1>, vector<8x128xf32>
    %31 = vector.broadcast %6 : f32 to vector<8x128xf32>
    %32 = arith.select %28, %31, %26 : vector<8x128xi1>, vector<8x128xf32>
    %c3_i32 = arith.constant 3 : i32
    %33 = vector.broadcast %c3_i32 : i32 to vector<8x128xi32>
    %34 = arith.cmpi eq, %4, %33 : vector<8x128xi32>
    %35 = vector.broadcast %8 : f32 to vector<8x128xf32>
    %36 = arith.select %34, %35, %30 : vector<8x128xi1>, vector<8x128xf32>
    %37 = vector.broadcast %7 : f32 to vector<8x128xf32>
    %38 = arith.select %34, %37, %32 : vector<8x128xi1>, vector<8x128xf32>
    %c4_i32 = arith.constant 4 : i32
    %39 = vector.broadcast %c4_i32 : i32 to vector<8x128xi32>
    %40 = arith.cmpi eq, %4, %39 : vector<8x128xi32>
    %41 = vector.broadcast %9 : f32 to vector<8x128xf32>
    %42 = arith.select %40, %41, %36 : vector<8x128xi1>, vector<8x128xf32>
    %43 = vector.broadcast %8 : f32 to vector<8x128xf32>
    %44 = arith.select %40, %43, %38 : vector<8x128xi1>, vector<8x128xf32>
    %c5_i32 = arith.constant 5 : i32
    %45 = vector.broadcast %c5_i32 : i32 to vector<8x128xi32>
    %46 = arith.cmpi eq, %4, %45 : vector<8x128xi32>
    %47 = vector.broadcast %10 : f32 to vector<8x128xf32>
    %48 = arith.select %46, %47, %42 : vector<8x128xi1>, vector<8x128xf32>
    %49 = vector.broadcast %9 : f32 to vector<8x128xf32>
    %50 = arith.select %46, %49, %44 : vector<8x128xi1>, vector<8x128xf32>
    %c6_i32 = arith.constant 6 : i32
    %51 = vector.broadcast %c6_i32 : i32 to vector<8x128xi32>
    %52 = arith.cmpi eq, %4, %51 : vector<8x128xi32>
    %53 = vector.broadcast %11 : f32 to vector<8x128xf32>
    %54 = arith.select %52, %53, %48 : vector<8x128xi1>, vector<8x128xf32>
    %55 = vector.broadcast %10 : f32 to vector<8x128xf32>
    %56 = arith.select %52, %55, %50 : vector<8x128xi1>, vector<8x128xf32>
    %c7_i32 = arith.constant 7 : i32
    %57 = vector.broadcast %c7_i32 : i32 to vector<8x128xi32>
    %58 = arith.cmpi eq, %4, %57 : vector<8x128xi32>
    %59 = vector.broadcast %12 : f32 to vector<8x128xf32>
    %60 = arith.select %58, %59, %54 : vector<8x128xi1>, vector<8x128xf32>
    %61 = vector.broadcast %11 : f32 to vector<8x128xf32>
    %62 = arith.select %58, %61, %56 : vector<8x128xi1>, vector<8x128xf32>
    %c8_i32 = arith.constant 8 : i32
    %63 = vector.broadcast %c8_i32 : i32 to vector<8x128xi32>
    %64 = arith.cmpi eq, %4, %63 : vector<8x128xi32>
    %65 = vector.broadcast %13 : f32 to vector<8x128xf32>
    %66 = arith.select %64, %65, %60 : vector<8x128xi1>, vector<8x128xf32>
    %67 = vector.broadcast %12 : f32 to vector<8x128xf32>
    %68 = arith.select %64, %67, %62 : vector<8x128xi1>, vector<8x128xf32>
    %c9_i32 = arith.constant 9 : i32
    %69 = vector.broadcast %c9_i32 : i32 to vector<8x128xi32>
    %70 = arith.cmpi eq, %4, %69 : vector<8x128xi32>
    %71 = vector.broadcast %13 : f32 to vector<8x128xf32>
    %72 = arith.select %70, %71, %68 : vector<8x128xi1>, vector<8x128xf32>
    %73 = arith.subf %66, %3 : vector<8x128xf32>
    %74 = arith.negf %73 : vector<8x128xf32>
    %75 = math.exp %74 : vector<8x128xf32>
    %cst_8 = arith.constant 1.000000e+00 : f32
    %76 = vector.broadcast %cst_8 : f32 to vector<8x128xf32>
    %77 = arith.addf %76, %75 : vector<8x128xf32>
    %78 = arith.divf %76, %77 : vector<8x128xf32>
    %79 = arith.subf %72, %3 : vector<8x128xf32>
    %80 = arith.negf %79 : vector<8x128xf32>
    %81 = math.exp %80 : vector<8x128xf32>
    %cst_9 = arith.constant 1.000000e+00 : f32
    %82 = vector.broadcast %cst_9 : f32 to vector<8x128xf32>
    %83 = arith.addf %82, %81 : vector<8x128xf32>
    %84 = arith.divf %82, %83 : vector<8x128xf32>
    %85 = arith.subf %78, %84 : vector<8x128xf32>
    %cst_10 = arith.constant 1.000000e-15 : f32
    %cst_11 = arith.constant 1.000000e+00 : f32
    %86 = vector.broadcast %cst_10 : f32 to vector<8x128xf32>
    %87 = arith.maximumf %86, %85 : vector<8x128xf32>
    %88 = vector.broadcast %cst_11 : f32 to vector<8x128xf32>
    %89 = arith.minimumf %88, %87 : vector<8x128xf32>
    %90 = math.log %89 : vector<8x128xf32>
    %c0_12 = arith.constant 0 : index
    %c0_13 = arith.constant 0 : index
    %91 = vector.load %arg4[%c0_12, %c0_13] : memref<8x128xf32, #tpu.memory_space<vmem>>, vector<8x128xf32>
    %92 = vector.shape_cast %90 : vector<8x128xf32> to vector<1x8x128xf32>
    %cst_14 = arith.constant dense<0.000000e+00> : vector<8x128xf32>
    %93 = vector.multi_reduction <add>, %92, %cst_14 [0] : vector<1x8x128xf32> to vector<8x128xf32>
    %94 = arith.addf %91, %93 : vector<8x128xf32>
    %c0_15 = arith.constant 0 : index
    %c0_16 = arith.constant 0 : index
    %95 = vector.load %arg4[%c0_15, %c0_16] : memref<8x128xf32, #tpu.memory_space<vmem>>, vector<8x128xf32>
    tpu.vector_store %arg4[%c0_15, %c0_16], %94 {strides = array<i32>} : memref<8x128xf32, #tpu.memory_space<vmem>>, vector<8x128xf32>,
    return
  }
  func.func @transform_0(%arg0: i32) -> i32 {
    %c0_i32 = arith.constant 0 : i32
    %c0_i32_0 = arith.constant 0 : i32
    return %c0_i32 : i32
  }
  func.func @transform_1(%arg0: i32) -> (i32, i32) {
    %c0_i32 = arith.constant 0 : i32
    %c0_i32_0 = arith.constant 0 : i32
    return %arg0, %c0_i32 : i32, i32
  }
  func.func @transform_2(%arg0: i32) -> (i32, i32) {
    %c0_i32 = arith.constant 0 : i32
    %c0_i32_0 = arith.constant 0 : i32
    return %arg0, %c0_i32 : i32, i32
  }
  func.func @transform_3(%arg0: i32) -> (i32, i32) {
    %c0_i32 = arith.constant 0 : i32
    %c0_i32_0 = arith.constant 0 : i32
    %c0_i32_1 = arith.constant 0 : i32
    return %c0_i32, %c0_i32_0 : i32, i32
  }
}

</mosaic_0001>

<llo_original>
// kernel: tpu_custom_call.1
$region0: #{tpu_custom_call.1}
  #allocation0 [shape = 'u32[]', space=smem, size = 0x4, offset = 0x4, fixed_abs, tag = 'smem constant byte address 0x4 - core index']
  #allocation1 [shape = 'u32[144,128]{1,0:T(1,128)}', space=vmem, size = 0x12000, scoped, tag = 'internal scratch']
  %s0 = inlined_call_operand.hbm [shape: f32[9], index: 0, kind: input, shape index: {}]
  %s1 = inlined_call_operand.hbm [shape: f32[8,128], index: 1, kind: input, shape index: {}]
  %s2 = inlined_call_operand.hbm [shape: s32[8,128], index: 2, kind: input, shape index: {}]
  %s3 = inlined_call_operand.hbm [shape: f32[8,128], index: 3, kind: output, shape index: {}]
  %s4 = sld [smem:[#allocation0]]
  $region38: #{tpu_custom_call.1} parent=0
    _
  %s6 = ssub.s32 1, %s4
  %s7 = scalar_select 0, %s6, %s4
  $region1: #{tpu_custom_call.1} parent=0
    #allocation2 [shape = 'u8[512]{0}', space=smem, size = 0x200, scoped, tag = 'input window, operand 0, single buffered']
    #allocation3 [shape = 's32[1]{0}', space=sflag, size = 0x4, scoped, tag = 'scoped memory for tpu_custom_call.1']
    #allocation4 [shape = 's32[1]{0}', space=sflag, size = 0x4, scoped, tag = 'scoped memory for tpu_custom_call.1']
    #allocation5 [shape = 's32[1]{0}', space=sflag, size = 0x4, scoped, tag = 'scoped memory for tpu_custom_call.1']
    #allocation6 [shape = 'u8[4096]{0}', space=vmem, size = 0x1000, scoped, tag = 'input window, operand 1, single buffered']
    #allocation7 [shape = 'u8[4096]{0}', space=vmem, size = 0x1000, scoped, tag = 'input window, operand 2, single buffered']
    #allocation8 [shape = 's32[1]{0}', space=sflag, size = 0x4, scoped, tag = 'scoped memory for tpu_custom_call.1']
    #allocation9 [shape = 'u8[4096]{0}', space=vmem, size = 0x1000, scoped, tag = 'output window, operand 0, single buffered']
    %8 = vsyncpa [#allocation5], 0
    %9 = vsyncpa [#allocation3], 0
    %10 = vsyncpa [#allocation8], 0
    %11 = vsyncpa [#allocation4], 0
    // Predicated region
    $region2: #{tpu_custom_call.1} parent=1 // pred_check
      _
    $region3: #{tpu_custom_call.1} parent=1 // pred_check_branch
      %13 = sbr.rel (0) target = $region5
    $region4: #{tpu_custom_call.1} parent=1 // pred_region
      %s15 = ssub.s32 16, 16
      %16 = vsyncadd [#allocation5], %s15
      %19 = dma.hbm_to_smem %s0, 16, [#allocation2], [#allocation5]
    $region5: #{tpu_custom_call.1} parent=1 // pred_fallthru
      _
    // Predicated region
    $region6: #{tpu_custom_call.1} parent=1 // pred_check
      _
    $region7: #{tpu_custom_call.1} parent=1 // pred_check_branch
      %21 = sbr.rel (0) target = $region9
    $region8: #{tpu_custom_call.1} parent=1 // pred_region
      %s23 = ssub.s32 128, 128
      %24 = vsyncadd [#allocation3], %s23
      %s26 = sshll.u32 [#allocation6], 4
      %s27 = int_to_ptr.vmem [resolvable:$true] %s26
      %29 = dma.hbm_to_vmem [thread:$0]  %s1, 128, %s27, [#allocation3]
    $region9: #{tpu_custom_call.1} parent=1 // pred_fallthru
      _
    // Predicated region
    $region10: #{tpu_custom_call.1} parent=1 // pred_check
      _
    $region11: #{tpu_custom_call.1} parent=1 // pred_check_branch
      %31 = sbr.rel (0) target = $region13
    $region12: #{tpu_custom_call.1} parent=1 // pred_region
      %s33 = ssub.s32 128, 128
      %34 = vsyncadd [#allocation8], %s33
      %s36 = sshll.u32 [#allocation7], 4
      %s37 = int_to_ptr.vmem [resolvable:$true] %s36
      %39 = dma.hbm_to_vmem [thread:$0]  %s2, 128, %s37, [#allocation8]
    $region13: #{tpu_custom_call.1} parent=1 // pred_fallthru
      _
    // Predicated region
    $region14: #{tpu_custom_call.1} parent=1 // pred_check
      _
    $region15: #{tpu_custom_call.1} parent=1 // pred_check_branch
      %41 = sbr.rel (0) target = $region17
    $region16: #{tpu_custom_call.1} parent=1 // pred_region
      %42 = dma.done [#allocation5], 16
    $region17: #{tpu_custom_call.1} parent=1 // pred_fallthru
      _
    // Predicated region
    $region18: #{tpu_custom_call.1} parent=1 // pred_check
      _
    $region19: #{tpu_custom_call.1} parent=1 // pred_check_branch
      %44 = sbr.rel (0) target = $region21
    $region20: #{tpu_custom_call.1} parent=1 // pred_region
      %45 = dma.done [#allocation3], 128
    $region21: #{tpu_custom_call.1} parent=1 // pred_fallthru
      _
    // Predicated region
    $region22: #{tpu_custom_call.1} parent=1 // pred_check
      _
    $region23: #{tpu_custom_call.1} parent=1 // pred_check_branch
      %47 = sbr.rel (0) target = $region25
    $region24: #{tpu_custom_call.1} parent=1 // pred_region
      %48 = dma.done [#allocation8], 128
    $region25: #{tpu_custom_call.1} parent=1 // pred_fallthru
      _
    %49 = sfence
    %p50 = scmp.eq.s32.totalorder 0, 0
    // Predicated region
    $region26: #{tpu_custom_call.1} parent=1 // pred_check
      %p51 = pneg %p50
    $region27: #{tpu_custom_call.1} parent=1 // pred_check_branch
      %53 = sbr.rel (%p51) target = $region29
    $region28: #{tpu_custom_call.1} parent=1 // pred_region
      %54 = vst [vmem:[#allocation9] sm:$0xff] 0.0
    $region29: #{tpu_custom_call.1} parent=1 // pred_fallthru
      _
    %v55 = vld [vmem:[#allocation6] sm:$0xff]
    %v56 = vld [vmem:[#allocation7] sm:$0xff]
    %s57 = sld [smem:[#allocation2]]
    %s58 = sld [smem:[#allocation2 + $0x1]]
    %s59 = sld [smem:[#allocation2 + $0x2]]
    %s60 = sld [smem:[#allocation2 + $0x3]]
    %s61 = sld [smem:[#allocation2 + $0x4]]
    %s62 = sld [smem:[#allocation2 + $0x5]]
    %s63 = sld [smem:[#allocation2 + $0x6]]
    %s64 = sld [smem:[#allocation2 + $0x7]]
    %s65 = sld [smem:[#allocation2 + $0x8]]
    %vm66 = vcmp.eq.s32.totalorder %v56, 0
    %v67 = vstv %s57
    %v68 = vsel %vm66, %v67, 1e+30
    %vm69 = vcmp.eq.s32.totalorder %v56, 1
    %v70 = vstv %s58
    %v71 = vsel %vm69, %v70, %v68
    %v72 = vsel %vm69, %v67, -1e+30
    %vm73 = vcmp.eq.s32.totalorder %v56, 2
    %v74 = vstv %s59
    %v75 = vsel %vm73, %v74, %v71
    %v76 = vsel %vm73, %v70, %v72
    %vm77 = vcmp.eq.s32.totalorder %v56, 3
    %v78 = vstv %s60
    %v79 = vsel %vm77, %v78, %v75
    %v80 = vsel %vm77, %v74, %v76
    %vm81 = vcmp.eq.s32.totalorder %v56, 4
    %v82 = vstv %s61
    %v83 = vsel %vm81, %v82, %v79
    %v84 = vsel %vm81, %v78, %v80
    %vm85 = vcmp.eq.s32.totalorder %v56, 5
    %v86 = vstv %s62
    %v87 = vsel %vm85, %v86, %v83
    %v88 = vsel %vm85, %v82, %v84
    %vm89 = vcmp.eq.s32.totalorder %v56, 6
    %v90 = vstv %s63
    %v91 = vsel %vm89, %v90, %v87
    %v92 = vsel %vm89, %v86, %v88
    %vm93 = vcmp.eq.s32.totalorder %v56, 7
    %v94 = vstv %s64
    %v95 = vsel %vm93, %v94, %v91
    %v96 = vsel %vm93, %v90, %v92
    %vm97 = vcmp.eq.s32.totalorder %v56, 8
    %v98 = vstv %s65
    %v99 = vsel %vm97, %v98, %v95
    %v100 = vsel %vm97, %v94, %v96
    %vm101 = vcmp.eq.s32.totalorder %v56, 9
    %v102 = vsel %vm101, %v98, %v100
    %v103 = vsub.f32 %v99, %v55
    %v104 = vxor.u32 %v103, 2147483648
    %v105 = vmul.f32 %v104, 1.442695
    %v106 = vpow.pop %v105
    %v107 = vadd.f32 %v106, 1.0
    %v108 = vrcp.pop %v107
    %v109 = vmul.f32 1.0, %v108
    %v110 = vsub.f32 %v102, %v55
    %v111 = vxor.u32 %v110, 2147483648
    %v112 = vmul.f32 %v111, 1.442695
    %v113 = vpow.pop %v112
    %v114 = vadd.f32 %v113, 1.0
    %v115 = vrcp.pop %v114
    %v116 = vmul.f32 1.0, %v115
    %v117 = vsub.f32 %v109, %v116
    %v118 = vmax.f32 %v117, 1e-15
    %v119 = vmin.f32 %v118, 1.0
    %v120 = vlog2.pop %v119
    %v121 = vmul.f32 %v120, 0.6931472
    %v122 = vld [vmem:[#allocation9] sm:$0xff]
    %v123 = vadd.f32 %v121, 0.0
    %v124 = vadd.f32 %v122, %v123
    %125 = vst [vmem:[#allocation9] sm:$0xff] %v124
    // Predicated region
    $region30: #{tpu_custom_call.1} parent=1 // pred_check
      _
    $region31: #{tpu_custom_call.1} parent=1 // pred_check_branch
      %127 = sbr.rel (0) target = $region33
    $region32: #{tpu_custom_call.1} parent=1 // pred_region
      %s129 = ssub.s32 128, 128
      %130 = vsyncadd [#allocation4], %s129
      %s132 = sshll.u32 [#allocation9], 4
      %s133 = int_to_ptr.vmem [resolvable:$true] %s132
      %135 = dma.vmem_to_hbm [thread:$0]  %s133, 128, %s3, [#allocation4]
    $region33: #{tpu_custom_call.1} parent=1 // pred_fallthru
      _
    // Predicated region
    $region34: #{tpu_custom_call.1} parent=1 // pred_check
      _
    $region35: #{tpu_custom_call.1} parent=1 // pred_check_branch
      %137 = sbr.rel (0) target = $region37
    $region36: #{tpu_custom_call.1} parent=1 // pred_region
      %138 = dma.done [#allocation4], 128
    $region37: #{tpu_custom_call.1} parent=1 // pred_fallthru
      _
    %139 = vsyncpa [#allocation3], 1
    %140 = vsyncpa [#allocation8], 1
    %141 = vsyncpa [#allocation4], 1
    %142 = vsyncpa [#allocation5], 1

</llo_original>
